<compile_context>
chip_gen: v5e
topology: v5e:2x2
jax: 0.10.0
libtpu: 0.0.40
codegen_flags: <defaults>
</compile_context>

<pallas_src>
import functools

import numpy as np
import jax
import jax.numpy as jnp
from jax.experimental import pallas as pl
from jax.experimental.pallas import tpu as pltpu

NODE_DIM = 128
HIDDEN_DIM = 64

# Atomic masses (amu), index = atomic number (0 = dummy), H .. Ca  (the module's
# ATOM_MASS buffer; only the elements needed for the test are included).
ATOM_MASS = np.array(
    [0.0, 1.008, 4.0026, 6.94, 9.0122, 10.81, 12.011, 14.007, 15.999, 18.998,
     20.180, 22.990, 24.305, 26.982, 28.085, 30.974, 32.06, 35.45, 39.948,
     39.098, 40.078], dtype=np.float32)


def _round_up(x, m):
    return (x + m - 1) // m * m


# ----------------------------- Pallas kernel ---------------------------------------------------
def spatial_out_kernel(xs_ref, coord_ref, mass_ref, brow_ref,
                       w1_ref, b1_ref, w2_ref, b2_ref, out_ref):
    f32 = jnp.float32
    n_pad = coord_ref.shape[0]
    g_pad = out_ref.shape[0]

    # Segment one-hot (scatter direction only):
    #   seg_gn[g, n] = 1  iff atom n belongs to graph g.
    # Padded atoms have batch id -1 -> all-zero columns.
    seg_gn = (jax.lax.broadcasted_iota(jnp.int32, (g_pad, n_pad), 0)
              == brow_ref[...]).astype(f32)

    coord = coord_ref[...]                                           # (n_pad, 3)
    m = mass_ref[...]                                                # (n_pad, 1)

    # scalar_out_mlp: Linear -> SiLU -> Linear   (s is (n_pad, 1))
    h = jnp.dot(xs_ref[...], w1_ref[...], preferred_element_type=f32) + b1_ref[...]
    h = h * (1.0 / (1.0 + jnp.exp(-h)))                              # SiLU
    s = jnp.dot(h, w2_ref[...], preferred_element_type=f32) + b2_ref[...]

    sp0 = jnp.sum(coord * coord, axis=1, keepdims=True)              # ||p_i||^2, (n_pad, 1)

    # Single fused segment reduction of every per-atom quantity we need:
    #   feats = [ m*p (3) | m (1) | s*p (3) | s (1) | s*||p||^2 (1) ]   -> (n_pad, 9)
    feats = jnp.concatenate([m * coord, m, s * coord, s, s * sp0], axis=1)
    red = jnp.dot(seg_gn, feats, preferred_element_type=f32)          # (g_pad, 9)

    sum_mp = red[:, 0:3]      # sum_i m_i p_i
    sum_m = red[:, 3:4]       # sum_i m_i
    sum_sp = red[:, 4:7]      # sum_i s_i p_i
    sum_s = red[:, 7:8]       # sum_i s_i
    sum_ssq = red[:, 8:9]     # sum_i s_i ||p_i||^2

    cent = sum_mp / jnp.where(sum_m > 0.0, sum_m, 1.0)               # guard padded graphs
    cross = jnp.sum(cent * sum_sp, axis=1, keepdims=True)            # c_g . sum_i s_i p_i
    cnorm = jnp.sum(cent * cent, axis=1, keepdims=True)              # ||c_g||^2

    # res_g = sum_i s_i ||p_i - c_g||^2
    out_ref[...] = sum_ssq - 2.0 * cross + cnorm * sum_s


# ----------------------------- wrapper ----------------------------------------------------------
@functools.partial(jax.jit, static_argnames=("num_graphs",))
def spatial_out_forward(x_scalar, x_spherical, coord, at_no, batch, params, *, num_graphs):
    del x_spherical  # accepted for signature parity; unused by SpatialOut.forward
    n = x_scalar.shape[0]
    n_pad = _round_up(max(n, 8), 8)
    g_pad = _round_up(max(num_graphs, 8), 8)
    pad_n = n_pad - n

    # buffer lookup: self.masses[at_no]
    masses = jnp.asarray(ATOM_MASS)[at_no][:, None].astype(jnp.float32)      # (n, 1)

    xs_p = jnp.pad(x_scalar.astype(jnp.float32), ((0, pad_n), (0, 0)))
    coord_p = jnp.pad(coord.astype(jnp.float32), ((0, pad_n), (0, 0)))
    mass_p = jnp.pad(masses, ((0, pad_n), (0, 0)))
    batch_p = jnp.pad(batch.astype(jnp.int32), (0, pad_n), constant_values=-1)
    brow = batch_p[None, :]                                                  # (1, n_pad)

    args = (xs_p, coord_p, mass_p, brow,
            params["W1"], params["b1"], params["W2"], params["b2"])

    out = pl.pallas_call(
        spatial_out_kernel,
        out_shape=jax.ShapeDtypeStruct((g_pad, 1), jnp.float32),
        grid_spec=pltpu.PrefetchScalarGridSpec(
            num_scalar_prefetch=0,
            grid=(1,),                                     # whole padded batch = one block
            in_specs=[pl.BlockSpec(a.shape, lambda i: (0, 0)) for a in args],
            out_specs=pl.BlockSpec((g_pad, 1), lambda i: (0, 0)),
        ),
        compiler_params=pltpu.CompilerParams(dimension_semantics=("arbitrary",)),
    )(*args)
    return out[:num_graphs]


# ----------------------------- params & plain-JAX reference ------------------------------------
def init_params(key):
    k1, k2 = jax.random.split(key)
    w1 = jax.random.normal(k1, (NODE_DIM, HIDDEN_DIM), jnp.float32) / np.sqrt(NODE_DIM)
    w2 = jax.random.normal(k2, (HIDDEN_DIM, 1), jnp.float32) / np.sqrt(HIDDEN_DIM)
    # nn.init.zeros_ on both biases in the module
    return dict(W1=w1, b1=jnp.zeros((1, HIDDEN_DIM), jnp.float32),
                W2=w2, b2=jnp.zeros((1, 1), jnp.float32))


def reference_forward(x_scalar, coord, at_no, batch, params, num_graphs):
    masses = jnp.asarray(ATOM_MASS)[at_no][:, None]
    num = jax.ops.segment_sum(masses * coord, batch, num_segments=num_graphs)
    den = jax.ops.segment_sum(masses, batch, num_segments=num_graphs)
    cent = num / den
    coord_c = coord - cent[batch]
    h = x_scalar @ params["W1"] + params["b1"]
    h = h * jax.nn.sigmoid(h)
    s = h @ params["W2"] + params["b2"]
    spatial = jnp.sum(coord_c ** 2, axis=1, keepdims=True)
    return jax.ops.segment_sum(s * spatial, batch, num_segments=num_graphs)


# ----------------------------- main -------------------------------------------------------------
if __name__ == "__main__":
    key = jax.random.PRNGKey(0)
    k_par, k_x, k_pos, k_z = jax.random.split(key, 4)

    # small deterministic "batch of molecules": 3 graphs, 20 atoms total
    n_atoms = 20
    num_graphs = 3
    batch = jnp.asarray(np.repeat(np.arange(num_graphs), [7, 6, 7]).astype(np.int32))
    at_no = jax.random.randint(k_z, (n_atoms,), 1, 11)                 # H .. Ne
    coord = jax.random.normal(k_pos, (n_atoms, 3), jnp.float32) * 2.0
    x_scalar = jax.random.normal(k_x, (n_atoms, NODE_DIM), jnp.float32)
    x_spherical = jax.random.normal(k_x, (n_atoms, 16), jnp.float32)   # unused by the module

    params = init_params(k_par)

    out = spatial_out_forward(x_scalar, x_spherical, coord, at_no, batch, params,
                              num_graphs=num_graphs)
    out = jax.block_until_ready(out)

    ref = jax.block_until_ready(
        reference_forward(x_scalar, coord, at_no, batch, params, num_graphs))

    assert out.shape == (num_graphs, 1)
    assert bool(jnp.all(jnp.isfinite(out)))
    max_err = float(jnp.max(jnp.abs(out - ref)))
    assert max_err < 1e-3, max_err

    print("KERNEL_OK")
</pallas_src>

<mosaic_0001>
module attributes {stable_mosaic.version = 11 : i64} {
  func.func @spatial_out_kernel(%arg0: i32, %arg1: memref<24x128xf32, #tpu.memory_space<vmem>>, %arg2: memref<24x3xf32, #tpu.memory_space<vmem>>, %arg3: memref<24x1xf32, #tpu.memory_space<vmem>>, %arg4: memref<1x24xi32, #tpu.memory_space<vmem>>, %arg5: memref<128x64xf32, #tpu.memory_space<vmem>>, %arg6: memref<1x64xf32, #tpu.memory_space<vmem>>, %arg7: memref<64x1xf32, #tpu.memory_space<vmem>>, %arg8: memref<1x1xf32, #tpu.memory_space<vmem>>, %arg9: memref<8x1xf32, #tpu.memory_space<vmem>>) attributes {dimension_semantics = [#tpu.dimension_semantics<arbitrary>], iteration_bounds = array<i64: 1>, scalar_prefetch = 0 : i64, scratch_operands = 0 : i64, tpu.core_type = #tpu.core_type<tc>, window_params = [{pipeline_mode = #tpu.pipeline_mode<synchronous>, transform_indices = @transform_0, window_bounds = array<i64: 24, 128>}, {pipeline_mode = #tpu.pipeline_mode<synchronous>, transform_indices = @transform_1, window_bounds = array<i64: 24, 3>}, {pipeline_mode = #tpu.pipeline_mode<synchronous>, transform_indices = @transform_2, window_bounds = array<i64: 24, 1>}, {pipeline_mode = #tpu.pipeline_mode<synchronous>, transform_indices = @transform_3, window_bounds = array<i64: 1, 24>}, {pipeline_mode = #tpu.pipeline_mode<synchronous>, transform_indices = @transform_4, window_bounds = array<i64: 128, 64>}, {pipeline_mode = #tpu.pipeline_mode<synchronous>, transform_indices = @transform_5, window_bounds = array<i64: 1, 64>}, {pipeline_mode = #tpu.pipeline_mode<synchronous>, transform_indices = @transform_6, window_bounds = array<i64: 64, 1>}, {pipeline_mode = #tpu.pipeline_mode<synchronous>, transform_indices = @transform_7, window_bounds = array<i64: 1, 1>}, {pipeline_mode = #tpu.pipeline_mode<synchronous>, transform_indices = @transform_8, window_bounds = array<i64: 8, 1>}]} {
    %0 = tpu.iota {dimensions = array<i32: 0>} : vector<8x24xi32>
    %c0 = arith.constant 0 : index
    %c0_0 = arith.constant 0 : index
    %1 = vector.load %arg4[%c0, %c0_0] : memref<1x24xi32, #tpu.memory_space<vmem>>, vector<1x24xi32>
    %2 = vector.broadcast %1 : vector<1x24xi32> to vector<8x24xi32>
    %3 = arith.cmpi eq, %0, %2 : vector<8x24xi32>
    %4 = arith.extui %3 : vector<8x24xi1> to vector<8x24xi32>
    %5 = arith.sitofp %4 : vector<8x24xi32> to vector<8x24xf32>
    %c0_1 = arith.constant 0 : index
    %c0_2 = arith.constant 0 : index
    %6 = vector.load %arg2[%c0_1, %c0_2] : memref<24x3xf32, #tpu.memory_space<vmem>>, vector<24x3xf32>
    %c0_3 = arith.constant 0 : index
    %c0_4 = arith.constant 0 : index
    %7 = vector.load %arg3[%c0_3, %c0_4] : memref<24x1xf32, #tpu.memory_space<vmem>>, vector<24x1xf32>
    %c0_5 = arith.constant 0 : index
    %c0_6 = arith.constant 0 : index
    %8 = vector.load %arg1[%c0_5, %c0_6] : memref<24x128xf32, #tpu.memory_space<vmem>>, vector<24x128xf32>
    %c0_7 = arith.constant 0 : index
    %c0_8 = arith.constant 0 : index
    %9 = vector.load %arg5[%c0_7, %c0_8] : memref<128x64xf32, #tpu.memory_space<vmem>>, vector<128x64xf32>
    %cst = arith.constant dense<0.000000e+00> : vector<24x64xf32>
    %10 = tpu.matmul %8, %9, %cst {dimension_numbers = #tpu.dot_dimension_numbers<[1], [0], [0], [1], [0, 0, 1, 1], [], []>} : vector<24x128xf32>, vector<128x64xf32>, vector<24x64xf32> -> vector<24x64xf32>
    %c0_9 = arith.constant 0 : index
    %c0_10 = arith.constant 0 : index
    %11 = vector.load %arg6[%c0_9, %c0_10] : memref<1x64xf32, #tpu.memory_space<vmem>>, vector<1x64xf32>
    %12 = vector.broadcast %11 : vector<1x64xf32> to vector<24x64xf32>
    %13 = arith.addf %10, %12 : vector<24x64xf32>
    %cst_11 = arith.constant 0.000000e+00 : f32
    %14 = vector.broadcast %cst_11 : f32 to vector<24x64xf32>
    %15 = arith.subf %14, %13 : vector<24x64xf32>
    %16 = math.exp %15 : vector<24x64xf32>
    %cst_12 = arith.constant 1.000000e+00 : f32
    %17 = vector.broadcast %cst_12 : f32 to vector<24x64xf32>
    %18 = arith.addf %17, %16 : vector<24x64xf32>
    %cst_13 = arith.constant 1.000000e+00 : f32
    %19 = vector.broadcast %cst_13 : f32 to vector<24x64xf32>
    %20 = arith.divf %19, %18 : vector<24x64xf32>
    %21 = arith.mulf %13, %20 : vector<24x64xf32>
    %c0_14 = arith.constant 0 : index
    %c0_15 = arith.constant 0 : index
    %22 = vector.load %arg7[%c0_14, %c0_15] : memref<64x1xf32, #tpu.memory_space<vmem>>, vector<64x1xf32>
    %cst_16 = arith.constant dense<0.000000e+00> : vector<24x1xf32>
    %23 = tpu.matmul %21, %22, %cst_16 {dimension_numbers = #tpu.dot_dimension_numbers<[1], [0], [0], [1], [0, 0, 1, 1], [], []>} : vector<24x64xf32>, vector<64x1xf32>, vector<24x1xf32> -> vector<24x1xf32>
    %c0_17 = arith.constant 0 : index
    %c0_18 = arith.constant 0 : index
    %24 = vector.load %arg8[%c0_17, %c0_18] : memref<1x1xf32, #tpu.memory_space<vmem>>, vector<1x1xf32>
    %25 = vector.broadcast %24 : vector<1x1xf32> to vector<24x1xf32>
    %26 = arith.addf %23, %25 : vector<24x1xf32>
    %27 = arith.mulf %6, %6 : vector<24x3xf32>
    %cst_19 = arith.constant dense<0.000000e+00> : vector<24xf32>
    %28 = vector.multi_reduction <add>, %27, %cst_19 [1] : vector<24x3xf32> to vector<24xf32>
    %29 = vector.shape_cast %28 : vector<24xf32> to vector<24x1xf32>
    %30 = vector.broadcast %7 : vector<24x1xf32> to vector<24x3xf32>
    %31 = arith.mulf %30, %6 : vector<24x3xf32>
    %32 = vector.broadcast %26 : vector<24x1xf32> to vector<24x3xf32>
    %33 = arith.mulf %32, %6 : vector<24x3xf32>
    %34 = arith.mulf %26, %29 : vector<24x1xf32>
    %35 = tpu.concatenate %31, %7, %33, %26, %34 in 1 : vector<24x3xf32>, vector<24x1xf32>, vector<24x3xf32>, vector<24x1xf32>, vector<24x1xf32> -> vector<24x9xf32>
    %cst_20 = arith.constant dense<0.000000e+00> : vector<8x9xf32>
    %36 = tpu.matmul %5, %35, %cst_20 {dimension_numbers = #tpu.dot_dimension_numbers<[1], [0], [0], [1], [0, 0, 1, 1], [], []>} : vector<8x24xf32>, vector<24x9xf32>, vector<8x9xf32> -> vector<8x9xf32>
    %37 = vector.extract_strided_slice %36 {offsets = [0, 0], sizes = [8, 3], strides = [1, 1]} : vector<8x9xf32> to vector<8x3xf32>
    %38 = vector.extract_strided_slice %36 {offsets = [0, 3], sizes = [8, 1], strides = [1, 1]} : vector<8x9xf32> to vector<8x1xf32>
    %39 = vector.extract_strided_slice %36 {offsets = [0, 4], sizes = [8, 3], strides = [1, 1]} : vector<8x9xf32> to vector<8x3xf32>
    %40 = vector.extract_strided_slice %36 {offsets = [0, 7], sizes = [8, 1], strides = [1, 1]} : vector<8x9xf32> to vector<8x1xf32>
    %41 = vector.extract_strided_slice %36 {offsets = [0, 8], sizes = [8, 1], strides = [1, 1]} : vector<8x9xf32> to vector<8x1xf32>
    %cst_21 = arith.constant 0.000000e+00 : f32
    %42 = vector.broadcast %cst_21 : f32 to vector<8x1xf32>
    %43 = arith.cmpf ogt, %38, %42 : vector<8x1xf32>
    %cst_22 = arith.constant 1.000000e+00 : f32
    %44 = vector.broadcast %cst_22 : f32 to vector<8x1xf32>
    %45 = arith.select %43, %38, %44 : vector<8x1xi1>, vector<8x1xf32>
    %46 = vector.broadcast %45 : vector<8x1xf32> to vector<8x3xf32>
    %47 = arith.divf %37, %46 : vector<8x3xf32>
    %48 = arith.mulf %47, %39 : vector<8x3xf32>
    %cst_23 = arith.constant dense<0.000000e+00> : vector<8xf32>
    %49 = vector.multi_reduction <add>, %48, %cst_23 [1] : vector<8x3xf32> to vector<8xf32>
    %50 = vector.shape_cast %49 : vector<8xf32> to vector<8x1xf32>
    %51 = arith.mulf %47, %47 : vector<8x3xf32>
    %cst_24 = arith.constant dense<0.000000e+00> : vector<8xf32>
    %52 = vector.multi_reduction <add>, %51, %cst_24 [1] : vector<8x3xf32> to vector<8xf32>
    %53 = vector.shape_cast %52 : vector<8xf32> to vector<8x1xf32>
    %cst_25 = arith.constant 2.000000e+00 : f32
    %54 = vector.broadcast %cst_25 : f32 to vector<8x1xf32>
    %55 = arith.mulf %54, %50 : vector<8x1xf32>
    %56 = arith.subf %41, %55 : vector<8x1xf32>
    %57 = arith.mulf %53, %40 : vector<8x1xf32>
    %58 = arith.addf %56, %57 : vector<8x1xf32>
    %c0_26 = arith.constant 0 : index
    %c0_27 = arith.constant 0 : index
    %59 = vector.load %arg9[%c0_26, %c0_27] : memref<8x1xf32, #tpu.memory_space<vmem>>, vector<8x1xf32>
    tpu.vector_store %arg9[%c0_26, %c0_27], %58 {strides = array<i32>} : memref<8x1xf32, #tpu.memory_space<vmem>>, vector<8x1xf32>,
    return
  }
  func.func @transform_0(%arg0: i32) -> (i32, i32) {
    %c0_i32 = arith.constant 0 : i32
    %c0_i32_0 = arith.constant 0 : i32
    %c0_i32_1 = arith.constant 0 : i32
    return %c0_i32, %c0_i32_0 : i32, i32
  }
  func.func @transform_1(%arg0: i32) -> (i32, i32) {
    %c0_i32 = arith.constant 0 : i32
    %c0_i32_0 = arith.constant 0 : i32
    %c0_i32_1 = arith.constant 0 : i32
    return %c0_i32, %c0_i32_0 : i32, i32
  }
  func.func @transform_2(%arg0: i32) -> (i32, i32) {
    %c0_i32 = arith.constant 0 : i32
    %c0_i32_0 = arith.constant 0 : i32
    %c0_i32_1 = arith.constant 0 : i32
    return %c0_i32, %c0_i32_0 : i32, i32
  }
  func.func @transform_3(%arg0: i32) -> (i32, i32) {
    %c0_i32 = arith.constant 0 : i32
    %c0_i32_0 = arith.constant 0 : i32
    %c0_i32_1 = arith.constant 0 : i32
    return %c0_i32, %c0_i32_0 : i32, i32
  }
  func.func @transform_4(%arg0: i32) -> (i32, i32) {
    %c0_i32 = arith.constant 0 : i32
    %c0_i32_0 = arith.constant 0 : i32
    %c0_i32_1 = arith.constant 0 : i32
    return %c0_i32, %c0_i32_0 : i32, i32
  }
  func.func @transform_5(%arg0: i32) -> (i32, i32) {
    %c0_i32 = arith.constant 0 : i32
    %c0_i32_0 = arith.constant 0 : i32
    %c0_i32_1 = arith.constant 0 : i32
    return %c0_i32, %c0_i32_0 : i32, i32
  }
  func.func @transform_6(%arg0: i32) -> (i32, i32) {
    %c0_i32 = arith.constant 0 : i32
    %c0_i32_0 = arith.constant 0 : i32
    %c0_i32_1 = arith.constant 0 : i32
    return %c0_i32, %c0_i32_0 : i32, i32
  }
  func.func @transform_7(%arg0: i32) -> (i32, i32) {
    %c0_i32 = arith.constant 0 : i32
    %c0_i32_0 = arith.constant 0 : i32
    %c0_i32_1 = arith.constant 0 : i32
    return %c0_i32, %c0_i32_0 : i32, i32
  }
  func.func @transform_8(%arg0: i32) -> (i32, i32) {
    %c0_i32 = arith.constant 0 : i32
    %c0_i32_0 = arith.constant 0 : i32
    %c0_i32_1 = arith.constant 0 : i32
    return %c0_i32, %c0_i32_0 : i32, i32
  }
}

</mosaic_0001>

<llo_original>
// kernel: spatial_out_forward.1
$region0: #{spatial_out_forward.1}
  #allocation0 [shape = 'u32[]', space=smem, size = 0x4, offset = 0x4, fixed_abs, tag = 'smem constant byte address 0x4 - core index']
  #allocation1 [shape = 'u32[72,128]{1,0:T(1,128)}', space=vmem, size = 0x9000, scoped, tag = 'internal scratch']
  #allocation2 [shape = 'f32[1,1]{1,0:T(1,128)S(1)}', space=vmem, size = 0x200, scoped, tag = 'scoped memory for spatial_out_forward.1']
  %s0 = inlined_call_operand.vmem [shape: f32[24,128], index: 0, kind: input, shape index: {}]
  %s1 = inlined_call_operand.vmem [shape: f32[24,3], index: 1, kind: input, shape index: {}]
  %s2 = inlined_call_operand.vmem [shape: f32[24,1], index: 2, kind: input, shape index: {}]
  %s3 = inlined_call_operand.vmem [shape: s32[1,24], index: 3, kind: input, shape index: {}]
  %s4 = inlined_call_operand.vmem [shape: f32[128,64], index: 4, kind: input, shape index: {}]
  %s5 = inlined_call_operand.vmem [shape: f32[1,64], index: 5, kind: input, shape index: {}]
  %s6 = inlined_call_operand.vmem [shape: f32[64,1], index: 6, kind: input, shape index: {}]
  %s7 = inlined_call_operand.<no memory space> [shape: f32[1,1], index: 7, kind: input, shape index: {}]
  %s8 = inlined_call_operand.vmem [shape: f32[8,1], index: 8, kind: output, shape index: {}]
  %s9 = sld [smem:[#allocation0]]
  $region42: #{spatial_out_forward.1} parent=0
    _
  %s11 = ssub.s32 1, %s9
  %s12 = scalar_select 0, %s11, %s9
  %v13 = vstv %s7
  %14 = vst [vmem:[#allocation2] sm:$0x1] %v13
  // Predicated region
  $region2: #{spatial_out_forward.1} parent=0 // pred_check
    _
  $region3: #{spatial_out_forward.1} parent=0 // pred_check_branch
    %16 = sbr.rel (0) target = $region5
  $region4: #{spatial_out_forward.1} parent=0 // pred_region
    _
  $region5: #{spatial_out_forward.1} parent=0 // pred_fallthru
    _
  // Predicated region
  $region6: #{spatial_out_forward.1} parent=0 // pred_check
    _
  $region7: #{spatial_out_forward.1} parent=0 // pred_check_branch
    %18 = sbr.rel (0) target = $region9
  $region8: #{spatial_out_forward.1} parent=0 // pred_region
    _
  $region9: #{spatial_out_forward.1} parent=0 // pred_fallthru
    _
  // Predicated region
  $region10: #{spatial_out_forward.1} parent=0 // pred_check
    _
  $region11: #{spatial_out_forward.1} parent=0 // pred_check_branch
    %20 = sbr.rel (0) target = $region13
  $region12: #{spatial_out_forward.1} parent=0 // pred_region
    _
  $region13: #{spatial_out_forward.1} parent=0 // pred_fallthru
    _
  // Predicated region
  $region14: #{spatial_out_forward.1} parent=0 // pred_check
    _
  $region15: #{spatial_out_forward.1} parent=0 // pred_check_branch
    %22 = sbr.rel (0) target = $region17
  $region16: #{spatial_out_forward.1} parent=0 // pred_region
    _
  $region17: #{spatial_out_forward.1} parent=0 // pred_fallthru
    _
  // Predicated region
  $region18: #{spatial_out_forward.1} parent=0 // pred_check
    _
  $region19: #{spatial_out_forward.1} parent=0 // pred_check_branch
    %24 = sbr.rel (0) target = $region21
  $region20: #{spatial_out_forward.1} parent=0 // pred_region
    _
  $region21: #{spatial_out_forward.1} parent=0 // pred_fallthru
    _
  // Predicated region
  $region22: #{spatial_out_forward.1} parent=0 // pred_check
    _
  $region23: #{spatial_out_forward.1} parent=0 // pred_check_branch
    %26 = sbr.rel (0) target = $region25
  $region24: #{spatial_out_forward.1} parent=0 // pred_region
    _
  $region25: #{spatial_out_forward.1} parent=0 // pred_fallthru
    _
  // Predicated region
  $region26: #{spatial_out_forward.1} parent=0 // pred_check
    _
  $region27: #{spatial_out_forward.1} parent=0 // pred_check_branch
    %28 = sbr.rel (0) target = $region29
  $region28: #{spatial_out_forward.1} parent=0 // pred_region
    _
  $region29: #{spatial_out_forward.1} parent=0 // pred_fallthru
    _
  // Predicated region
  $region30: #{spatial_out_forward.1} parent=0 // pred_check
    _
  $region31: #{spatial_out_forward.1} parent=0 // pred_check_branch
    %30 = sbr.rel (0) target = $region33
  $region32: #{spatial_out_forward.1} parent=0 // pred_region
    _
  $region33: #{spatial_out_forward.1} parent=0 // pred_fallthru
    _
  %v31 = vlaneseq
  %v32 = vshrl.u32 %v31, 7
  %v33 = vld [vmem:[%s3] sm:$0x1]
  %v34 = vperm.slane %v33, 0
  %vm35 = vcmp.eq.s32.totalorder %v32, %v34
  %v36 = vsel %vm35, 1, 0
  %v37 = vcvt.s32.f32 %v36
  %v38 = vld [vmem:[%s1] sm:$0xff]
  %v39 = vld [vmem:[%s1 + $0x8] sm:$0xff]
  %v40 = vld [vmem:[%s1 + $0x10] sm:$0xff]
  %v41 = vld [vmem:[%s2] sm:$0xff]
  %v42 = vld [vmem:[%s2 + $0x8] sm:$0xff]
  %v43 = vld [vmem:[%s2 + $0x10] sm:$0xff]
  %v44 = vld [vmem:[%s0] sm:$0xff]
  %v45 = vld [vmem:[%s0 + $0x8] sm:$0xff]
  %v46 = vld [vmem:[%s0 + $0x10] sm:$0xff]
  %v47 = vld [vmem:[%s4] sm:$0xff]
  %v48 = vld [vmem:[%s4 + $0x8] sm:$0xff]
  %v49 = vld [vmem:[%s4 + $0x10] sm:$0xff]
  %v50 = vld [vmem:[%s4 + $0x18] sm:$0xff]
  %v51 = vld [vmem:[%s4 + $0x20] sm:$0xff]
  %v52 = vld [vmem:[%s4 + $0x28] sm:$0xff]
  %v53 = vld [vmem:[%s4 + $0x30] sm:$0xff]
  %v54 = vld [vmem:[%s4 + $0x38] sm:$0xff]
  %v55 = vld [vmem:[%s4 + $0x40] sm:$0xff]
  %v56 = vld [vmem:[%s4 + $0x48] sm:$0xff]
  %v57 = vld [vmem:[%s4 + $0x50] sm:$0xff]
  %v58 = vld [vmem:[%s4 + $0x58] sm:$0xff]
  %v59 = vld [vmem:[%s4 + $0x60] sm:$0xff]
  %v60 = vld [vmem:[%s4 + $0x68] sm:$0xff]
  %v61 = vld [vmem:[%s4 + $0x70] sm:$0xff]
  %v62 = vld [vmem:[%s4 + $0x78] sm:$0xff]
  %v63 = vld [vmem:[%s5] sm:$0x1]
  %v65 = vperm.slane %v63, 0
  %67 = vmatpush.msra.mxu0 %v62
  %68 = vmatpush.msra.mxu0 %v61
  %69 = vmatpush.msra.mxu0 %v60
  %70 = vmatpush.msra.mxu0 %v59
  %71 = vmatpush.msra.mxu0 %v58
  %72 = vmatpush.msra.mxu0 %v57
  %73 = vmatpush.msra.mxu0 %v56
  %74 = vmatpush.msra.mxu0 %v55
  %75 = vmatpush.msra.mxu0 %v54
  %76 = vmatpush.msra.mxu0 %v53
  %77 = vmatpush.msra.mxu0 %v52
  %78 = vmatpush.msra.mxu0 %v51
  %79 = vmatpush.msra.mxu0 %v50
  %80 = vmatpush.msra.mxu0 %v49
  %81 = vmatpush.msra.mxu0 %v48
  %82 = vmatpush.msra.mxu0 %v47
  %83 = vmatmul.f32.gmra.mxu0 %v44
  %v84 = vpop.f32.mrf.mxu0
  %v85 = vadd.f32 %v65, %v84
  %86 = vmatmul.f32.gmra.mxu0 %v45
  %v87 = vpop.f32.mrf.mxu0
  %v88 = vadd.f32 %v65, %v87
  %89 = vmatmul.f32.gmra.mxu0 %v46
  %v90 = vpop.f32.mrf.mxu0
  %v91 = vadd.f32 %v65, %v90
  %92 = vdwg.mxu0
  %v93 = vsub.f32 0.0, %v85
  %v94 = vsub.f32 0.0, %v88
  %v95 = vsub.f32 0.0, %v91
  %v96 = vmul.f32 %v93, 1.442695
  %v97 = vpow.pop %v96
  %v98 = vmul.f32 %v94, 1.442695
  %v99 = vpow.pop %v98
  %v100 = vmul.f32 %v95, 1.442695
  %v101 = vpow.pop %v100
  %v102 = vadd.f32 %v97, 1.0
  %v103 = vadd.f32 %v99, 1.0
  %v104 = vadd.f32 %v101, 1.0
  %v105 = vrcp.pop %v102
  %v106 = vmul.f32 %v102, %v105
  %v107 = vsub.f32 1.0, %v106
  %v108 = vmul.f32 %v105, %v107
  %v109 = vadd.f32 %v105, %v108
  %vm110 = vweird.f32 %v102
  %vm111 = vweird.f32 %v105
  %vm112 = vmor %vm110, %vm111
  %v113 = vsel %vm112, %v105, %v109
  %v114 = vand.u32 2147483647, %v102
  %vm115 = vcmp.eq.f32.partialorder %v114, 8.507059e+37
  %v116 = vand.u32 %v102, 2147483648
  %v117 = vor.u32 1.1754944e-38, %v116
  %v118 = vsel %vm115, %v117, %v113
  %v119 = vmul.f32 1.0, %v118
  %v120 = vrcp.pop %v103
  %v121 = vmul.f32 %v103, %v120
  %v122 = vsub.f32 1.0, %v121
  %v123 = vmul.f32 %v120, %v122
  %v124 = vadd.f32 %v120, %v123
  %vm125 = vweird.f32 %v103
  %vm126 = vweird.f32 %v120
  %vm127 = vmor %vm125, %vm126
  %v128 = vsel %vm127, %v120, %v124
  %v129 = vand.u32 2147483647, %v103
  %vm130 = vcmp.eq.f32.partialorder %v129, 8.507059e+37
  %v131 = vand.u32 %v103, 2147483648
  %v132 = vor.u32 1.1754944e-38, %v131
  %v133 = vsel %vm130, %v132, %v128
  %v134 = vmul.f32 1.0, %v133
  %v135 = vrcp.pop %v104
  %v136 = vmul.f32 %v104, %v135
  %v137 = vsub.f32 1.0, %v136
  %v138 = vmul.f32 %v135, %v137
  %v139 = vadd.f32 %v135, %v138
  %vm140 = vweird.f32 %v104
  %vm141 = vweird.f32 %v135
  %vm142 = vmor %vm140, %vm141
  %v143 = vsel %vm142, %v135, %v139
  %v144 = vand.u32 2147483647, %v104
  %vm145 = vcmp.eq.f32.partialorder %v144, 8.507059e+37
  %v146 = vand.u32 %v104, 2147483648
  %v147 = vor.u32 1.1754944e-38, %v146
  %v148 = vsel %vm145, %v147, %v143
  %v149 = vmul.f32 1.0, %v148
  %v150 = vmul.f32 %v85, %v119
  %v151 = vmul.f32 %v88, %v134
  %v152 = vmul.f32 %v91, %v149
  %v153 = vld [vmem:[%s6] sm:$0xff]
  %v154 = vld [vmem:[%s6 + $0x8] sm:$0xff]
  %v155 = vld [vmem:[%s6 + $0x10] sm:$0xff]
  %v156 = vld [vmem:[%s6 + $0x18] sm:$0xff]
  %v157 = vld [vmem:[%s6 + $0x20] sm:$0xff]
  %v158 = vld [vmem:[%s6 + $0x28] sm:$0xff]
  %v159 = vld [vmem:[%s6 + $0x30] sm:$0xff]
  %v160 = vld [vmem:[%s6 + $0x38] sm:$0xff]
  %v161 = vld [vmem:[#allocation2] sm:$0x1]
  %v163 = vperm.slane %v161, 0
  %vm165 = vcmask 523264
  %v167 = vsel %vm165, %v150, 0
  %v170 = vsel %vm165, %v151, 0
  %v173 = vsel %vm165, %v152, 0
  %175 = vmatpush.msra.mxu0 0.0
  %176 = vmatpush.msra.mxu0 0.0
  %177 = vmatpush.msra.mxu0 0.0
  %178 = vmatpush.msra.mxu0 0.0
  %179 = vmatpush.msra.mxu0 0.0
  %180 = vmatpush.msra.mxu0 0.0
  %181 = vmatpush.msra.mxu0 0.0
  %182 = vmatpush.msra.mxu0 0.0
  %183 = vmatpush.msra.mxu0 %v160
  %184 = vmatpush.msra.mxu0 %v159
  %185 = vmatpush.msra.mxu0 %v158
  %186 = vmatpush.msra.mxu0 %v157
  %187 = vmatpush.msra.mxu0 %v156
  %188 = vmatpush.msra.mxu0 %v155
  %189 = vmatpush.msra.mxu0 %v154
  %190 = vmatpush.msra.mxu0 %v153
  %191 = vmatmul.f32.gmra.mxu0 %v167
  %v192 = vpop.f32.mrf.mxu0
  %v193 = vadd.f32 %v163, %v192
  %194 = vmatmul.f32.gmra.mxu0 %v170
  %v195 = vpop.f32.mrf.mxu0
  %v196 = vadd.f32 %v163, %v195
  %197 = vmatmul.f32.gmra.mxu0 %v173
  %v198 = vpop.f32.mrf.mxu0
  %v199 = vadd.f32 %v163, %v198
  %200 = vdwg.mxu0
  %v201 = vmul.f32 %v38, %v38
  %v202 = vmul.f32 %v39, %v39
  %v203 = vmul.f32 %v40, %v40
  %vm204 = vcmask 23552
  %v205 = vsel %vm204, %v201, 0.0
  %206 = vadd.xlane.f32.xlu0 %v205
  %v207 = vpop.xlane.xlu0 %206
  %v208 = vsel %vm204, %v202, 0.0
  %209 = vadd.xlane.f32.xlu0 %v208
  %v210 = vpop.xlane.xlu0 %209
  %v211 = vsel %vm204, %v203, 0.0
  %212 = vadd.xlane.f32.xlu0 %v211
  %v213 = vpop.xlane.xlu0 %212
  %215 = vset.pattern.permute.xlu0 0
  %216 = vperm.xlu0 %215, %v41
  %v217 = vpop.permute.xlu0 %216
  %220 = vset.pattern.permute.xlu0 0
  %221 = vperm.xlu0 %220, %v42
  %v222 = vpop.permute.xlu0 %221
  %225 = vset.pattern.permute.xlu0 0
  %226 = vperm.xlu0 %225, %v43
  %v227 = vpop.permute.xlu0 %226
  %v229 = vmul.f32 %v217, %v38
  %v230 = vmul.f32 %v222, %v39
  %v231 = vmul.f32 %v227, %v40
  %233 = vset.pattern.permute.xlu0 0
  %234 = vperm.xlu0 %233, %v193
  %v235 = vpop.permute.xlu0 %234
  %238 = vset.pattern.permute.xlu0 0
  %239 = vperm.xlu0 %238, %v196
  %v240 = vpop.permute.xlu0 %239
  %243 = vset.pattern.permute.xlu0 0
  %244 = vperm.xlu0 %243, %v199
  %v245 = vpop.permute.xlu0 %244
  %v247 = vmul.f32 %v235, %v38
  %v248 = vmul.f32 %v240, %v39
  %v249 = vmul.f32 %v245, %v40
  %v250 = vmul.f32 %v193, %v207
  %v251 = vmul.f32 %v196, %v210
  %v252 = vmul.f32 %v199, %v213
  %253 = vrot.lane.b32.xlu0 %v41, 3
  %v254 = vpop.permute.xlu0 %253
  %255 = vrot.lane.b32.xlu0 %v42, 3
  %v256 = vpop.permute.xlu0 %255
  %257 = vrot.lane.b32.xlu0 %v43, 3
  %v258 = vpop.permute.xlu0 %257
  %265 = vrot.lane.b32.xlu0 %v247, 4
  %v266 = vpop.permute.xlu0 %265
  %267 = vrot.lane.b32.xlu0 %v248, 4
  %v268 = vpop.permute.xlu0 %267
  %269 = vrot.lane.b32.xlu0 %v249, 4
  %v270 = vpop.permute.xlu0 %269
  %274 = vrot.lane.b32.xlu0 %v193, 7
  %v275 = vpop.permute.xlu0 %274
  %276 = vrot.lane.b32.xlu0 %v196, 7
  %v277 = vpop.permute.xlu0 %276
  %278 = vrot.lane.b32.xlu0 %v199, 7
  %v279 = vpop.permute.xlu0 %278
  %286 = vrot.lane.b32.xlu0 %v250, 8
  %v287 = vpop.permute.xlu0 %286
  %288 = vrot.lane.b32.xlu0 %v251, 8
  %v289 = vpop.permute.xlu0 %288
  %290 = vrot.lane.b32.xlu0 %v252, 8
  %v291 = vpop.permute.xlu0 %290
  %v295 = vsel %vm204, %v229, %v254
  %v296 = vsel %vm204, %v230, %v256
  %v297 = vsel %vm204, %v231, %v258
  %vm298 = vcmask 31744
  %v299 = vsel %vm298, %v295, %v266
  %v300 = vsel %vm298, %v296, %v268
  %v301 = vsel %vm298, %v297, %v270
  %vm302 = vcmask 56320
  %v303 = vsel %vm302, %v299, %v275
  %v304 = vsel %vm302, %v300, %v277
  %v305 = vsel %vm302, %v301, %v279
  %vm306 = vcmask 64512
  %v307 = vsel %vm306, %v303, %v287
  %v308 = vsel %vm306, %v304, %v289
  %v309 = vsel %vm306, %v305, %v291
  %vm310 = vcmask 195584
  %v312 = vsel %vm310, %v37, 0
  %314 = vmatpush.msra.mxu0 0.0
  %315 = vmatpush.msra.mxu0 0.0
  %316 = vmatpush.msra.mxu0 0.0
  %317 = vmatpush.msra.mxu0 0.0
  %318 = vmatpush.msra.mxu0 0.0
  %319 = vmatpush.msra.mxu0 0.0
  %320 = vmatpush.msra.mxu0 0.0
  %321 = vmatpush.msra.mxu0 0.0
  %322 = vmatpush.msra.mxu0 0.0
  %323 = vmatpush.msra.mxu0 0.0
  %324 = vmatpush.msra.mxu0 0.0
  %325 = vmatpush.msra.mxu0 0.0
  %326 = vmatpush.msra.mxu0 0.0
  %327 = vmatpush.msra.mxu0 %v309
  %328 = vmatpush.msra.mxu0 %v308
  %329 = vmatpush.msra.mxu0 %v307
  %330 = vmatmul.f32.gmra.mxu0 %v312
  %v331 = vpop.f32.mrf.mxu0
  %v332 = vadd.f32 0.0, %v331
  %333 = vdwg.mxu0
  %vm334 = vcmp.gt.f32.partialorder %v332, 0.0
  %v335 = vsel %vm334, %v332, 1.0
  %337 = vset.pattern.permute.xlu0 3
  %338 = vperm.xlu0 %337, %v335
  %v339 = vpop.permute.xlu0 %338
  %v341 = vrcp.pop %v339
  %v342 = vmul.f32 %v339, %v341
  %v343 = vsub.f32 1.0, %v342
  %v344 = vmul.f32 %v341, %v343
  %v345 = vadd.f32 %v341, %v344
  %vm346 = vweird.f32 %v339
  %vm347 = vweird.f32 %v341
  %vm348 = vmor %vm346, %vm347
  %v349 = vsel %vm348, %v341, %v345
  %v350 = vand.u32 2147483647, %v339
  %vm351 = vcmp.eq.f32.partialorder %v350, 8.507059e+37
  %v352 = vand.u32 %v339, 2147483648
  %v353 = vor.u32 1.1754944e-38, %v352
  %v354 = vsel %vm351, %v353, %v349
  %v355 = vmul.f32 %v332, %v354
  %357 = vrot.lane.b32.xlu0 %v332, 124
  %v358 = vpop.permute.xlu0 %357
  %v360 = vmul.f32 %v355, %v358
  %v361 = vsel %vm204, %v360, 0.0
  %362 = vadd.xlane.f32.xlu0 %v361
  %v363 = vpop.xlane.xlu0 %362
  %v364 = vmul.f32 %v355, %v355
  %v365 = vsel %vm204, %v364, 0.0
  %366 = vadd.xlane.f32.xlu0 %v365
  %v367 = vpop.xlane.xlu0 %366
  %v368 = vmul.f32 %v363, 2.0
  %v369 = vsub.f32 %v332, %v368
  %v370 = vmul.f32 %v367, %v332
  %372 = vrot.lane.b32.xlu0 %v370, 1
  %v373 = vpop.permute.xlu0 %372
  %v375 = vadd.f32 %v369, %v373
  %377 = vrot.lane.b32.xlu0 %v375, 120
  %v378 = vpop.permute.xlu0 %377
  %vm380 = vcmask 7168
  %381 = vst.msk [vmem:[%s8] sm:$0xff] %vm380, %v378
  // Predicated region
  $region34: #{spatial_out_forward.1} parent=0 // pred_check
    _
  $region35: #{spatial_out_forward.1} parent=0 // pred_check_branch
    %383 = sbr.rel (0) target = $region37
  $region36: #{spatial_out_forward.1} parent=0 // pred_region
    _
  $region37: #{spatial_out_forward.1} parent=0 // pred_fallthru
    _
  // Predicated region
  $region38: #{spatial_out_forward.1} parent=0 // pred_check
    _
  $region39: #{spatial_out_forward.1} parent=0 // pred_check_branch
    %385 = sbr.rel (0) target = $region41
  $region40: #{spatial_out_forward.1} parent=0 // pred_region
    _
  $region41: #{spatial_out_forward.1} parent=0 // pred_fallthru
    _

</llo_original>
